<compile_context>
chip_gen: v6e
topology: v6e:2x2x1
jax: 0.10.0
libtpu: 0.0.40
codegen_flags: <defaults>
</compile_context>

<pallas_src>
import functools

import jax
import jax.numpy as jnp
from jax import lax
from jax.experimental import pallas as pl
from jax.experimental.pallas import tpu as pltpu


def _round_up(x, m):
    return ((x + m - 1) // m) * m


def _actor_critic_kernel(state_ref, w1_ref, w2_ref, w3_ref, bias_ref, out_ref,
                         *, action_dim):
    A = action_dim

    x = state_ref[...]                              # (bb, S) f32
    bias = bias_ref[...]                            # (8, 512) f32 packed slab

    b1 = bias[0:1, :]                               # (1, 512)  [b1a | bc1]
    b2 = bias[1:2, 0:256]                           # (1, 256)  [b2a | bc2]
    b3 = bias[2:3, 0:128]                           # (1, 128)  [b3a | bc3 | 0]

    # ---- layer 1: actor+critic fused along output axis (one MXU matmul)
    h1 = jnp.tanh(
        jnp.dot(x.astype(jnp.bfloat16), w1_ref[...],
                preferred_element_type=jnp.float32) + b1)        # (bb, 512)

    # ---- layer 2: block-diagonal W2 (512,256); single matmul, no copies
    h2 = jnp.tanh(
        jnp.dot(h1.astype(jnp.bfloat16), w2_ref[...],
                preferred_element_type=jnp.float32) + b2)        # (bb, 256)

    # ---- layer 3: block-diagonal W3 (256,128);
    #      cols 0:A = actor head pre-activation, col A = critic value
    z = jnp.dot(h2.astype(jnp.bfloat16), w3_ref[...],
                preferred_element_type=jnp.float32) + b3         # (bb, 128)

    # ---- lane-dense output slab: tanh on actor cols, raw value in col A
    col = lax.broadcasted_iota(jnp.int32, z.shape, 1)
    out_ref[...] = jnp.where(col < A, jnp.tanh(z), z)


def fuse_params(p):
    """Pack per-layer params into the fused slabs the kernel consumes."""
    A = p["w3a"].shape[1]
    assert A + 1 <= 128, "action_dim must be <= 127 for the packed output slab"

    # layer 1: concat along output axis
    w1 = jnp.concatenate([p["w1a"], p["wc1"]], axis=1)           # (S, 512)

    # layer 2: block-diagonal (actor rows 0:256 -> cols 0:128,
    #                          critic rows 256:512 -> cols 128:256)
    w2 = jnp.zeros((512, 256), jnp.float32)
    w2 = w2.at[0:256, 0:128].set(p["w2a"]).at[256:512, 128:256].set(p["wc2"])

    # layer 3: block-diagonal (actor rows 0:128 -> cols 0:A,
    #                          critic rows 128:256 -> col A)
    w3 = jnp.zeros((256, 128), jnp.float32)
    w3 = w3.at[0:128, 0:A].set(p["w3a"]).at[128:256, A:A + 1].set(p["wc3"])

    bias = jnp.zeros((8, 512), jnp.float32)
    bias = bias.at[0, 0:256].set(p["b1a"].reshape(-1))
    bias = bias.at[0, 256:512].set(p["bc1"].reshape(-1))
    bias = bias.at[1, 0:128].set(p["b2a"].reshape(-1))
    bias = bias.at[1, 128:256].set(p["bc2"].reshape(-1))
    bias = bias.at[2, 0:A].set(p["b3a"].reshape(-1))
    bias = bias.at[2, A:A + 1].set(p["bc3"].reshape(-1))

    return dict(
        w1=w1.astype(jnp.bfloat16),
        w2=w2.astype(jnp.bfloat16),
        w3=w3.astype(jnp.bfloat16),
        bias=bias,
        log_std=p["log_std"].reshape(-1),
        action_dim=A,
    )


def actor_critic_forward(state, fused, block_b=1024):
    """state: (B, state_dim) f32. Returns (action_mean, action_std, state_value)."""
    A = int(fused["action_dim"])
    B, S = state.shape

    # batch block: multiple of 8 sublanes; big enough to amortize per-step
    # overhead; capped so the grid has >= 2 steps (both TCs used on v7x).
    bb = _round_up(min(block_b, max(B, 8)), 8)
    if B >= 16:
        bb = min(bb, _round_up((B + 1) // 2, 8))
    Bp = _round_up(B, bb)
    if Bp != B:
        state = jnp.pad(state, ((0, Bp - B), (0, 0)))
    grid = (Bp // bb,)

    flops = 2 * Bp * (S * 512 + 512 * 256 + 256 * 128)
    transcendentals = Bp * (512 + 256 + A)
    bytes_accessed = (4 * Bp * S                                    # state
                      + 2 * (S * 512 + 512 * 256 + 256 * 128)      # bf16 weights
                      + 4 * 8 * 512                                 # bias slab
                      + 4 * Bp * 128)                               # output slab

    out = pl.pallas_call(
        functools.partial(_actor_critic_kernel, action_dim=A),
        out_shape=jax.ShapeDtypeStruct((Bp, 128), jnp.float32),
        grid=grid,
        in_specs=[
            pl.BlockSpec((bb, S), lambda i: (i, 0)),            # state block
            pl.BlockSpec((S, 512), lambda i: (0, 0)),           # fused W1 (bf16)
            pl.BlockSpec((512, 256), lambda i: (0, 0)),         # block-diag W2 (bf16)
            pl.BlockSpec((256, 128), lambda i: (0, 0)),         # block-diag W3 (bf16)
            pl.BlockSpec((8, 512), lambda i: (0, 0)),           # packed biases (f32)
        ],
        out_specs=pl.BlockSpec((bb, 128), lambda i: (i, 0)),    # lane-dense slab
        compiler_params=pltpu.CompilerParams(
            dimension_semantics=("parallel",),
            vmem_limit_bytes=48 * 1024 * 1024),
        cost_estimate=pl.CostEstimate(
            flops=flops,
            transcendentals=transcendentals,
            bytes_accessed=bytes_accessed),
    )(state, fused["w1"], fused["w2"], fused["w3"], fused["bias"])

    mean = out[:B, 0:A]                       # (B, A)
    value = out[:B, A:A + 1]                  # (B, 1)
    std = jnp.exp(fused["log_std"])           # (A,)  state-independent
    return mean, std, value
    # TODO(synk): for per-env-step rollouts (tiny B, called every step) the
    # kernel is launch/weight-DMA bound; batch rollout steps per call or keep
    # weights cross-call resident if this sits on the critical path.


def init_params(key, state_dim, action_dim):
    """PyTorch-default-style init (uniform +/- 1/sqrt(fan_in)).
    Weights stored as (in_features, out_features); biases as (1, out)."""
    def linear(k, fan_in, fan_out):
        kw, kb = jax.random.split(k)
        bound = 1.0 / jnp.sqrt(jnp.float32(fan_in))
        w = jax.random.uniform(kw, (fan_in, fan_out), jnp.float32, -bound, bound)
        b = jax.random.uniform(kb, (1, fan_out), jnp.float32, -bound, bound)
        return w, b

    keys = jax.random.split(key, 6)
    w1a, b1a = linear(keys[0], state_dim, 256)
    w2a, b2a = linear(keys[1], 256, 128)
    w3a, b3a = linear(keys[2], 128, action_dim)
    wc1, bc1 = linear(keys[3], state_dim, 256)
    wc2, bc2 = linear(keys[4], 256, 128)
    wc3, bc3 = linear(keys[5], 128, 1)
    log_std = jnp.zeros((1, action_dim), jnp.float32)   # nn.Parameter(zeros)

    return dict(
        w1a=w1a, b1a=b1a, w2a=w2a, b2a=b2a, w3a=w3a, b3a=b3a,
        log_std=log_std,
        wc1=wc1, bc1=bc1, wc2=wc2, bc2=bc2, wc3=wc3, bc3=bc3,
    )


def _reference_forward(state, p):
    """Pure-JAX f32 reference, mirrors the PyTorch module."""
    h = jnp.tanh(state @ p["w1a"] + p["b1a"])
    h = jnp.tanh(h @ p["w2a"] + p["b2a"])
    mean = jnp.tanh(h @ p["w3a"] + p["b3a"])
    std = jnp.exp(p["log_std"].reshape(-1))
    c = jnp.tanh(state @ p["wc1"] + p["bc1"])
    c = jnp.tanh(c @ p["wc2"] + p["bc2"])
    value = c @ p["wc3"] + p["bc3"]
    return mean, std, value


if __name__ == "__main__":
    key = jax.random.PRNGKey(0)
    k_param, k_state = jax.random.split(key)

    B, STATE_DIM, ACTION_DIM = 8, 16, 8

    params = init_params(k_param, STATE_DIM, ACTION_DIM)
    state = jax.random.normal(k_state, (B, STATE_DIM), jnp.float32)

    fused = fuse_params(params)
    mean, std, value = actor_critic_forward(state, fused)
    jax.block_until_ready((mean, std, value))

    # sanity check against pure-JAX f32 reference (bf16 MXU path -> looser tol)
    ref_mean, ref_std, ref_value = _reference_forward(state, params)
    assert mean.shape == (B, ACTION_DIM)
    assert std.shape == (ACTION_DIM,)
    assert value.shape == (B, 1)
    assert jnp.allclose(mean, ref_mean, atol=3e-2)
    assert jnp.allclose(std, ref_std, atol=1e-6)
    assert jnp.allclose(value, ref_value, atol=3e-2)

    print("KERNEL_OK")
</pallas_src>

<mosaic_0001>
module attributes {stable_mosaic.version = 11 : i64} {
  func.func @_actor_critic_kernel(%arg0: i32, %arg1: memref<8x16xf32, #tpu.memory_space<vmem>>, %arg2: memref<16x512xbf16, #tpu.memory_space<vmem>>, %arg3: memref<512x256xbf16, #tpu.memory_space<vmem>>, %arg4: memref<256x128xbf16, #tpu.memory_space<vmem>>, %arg5: memref<8x512xf32, #tpu.memory_space<vmem>>, %arg6: memref<8x128xf32, #tpu.memory_space<vmem>>) attributes {dimension_semantics = [#tpu.dimension_semantics<parallel>], iteration_bounds = array<i64: 1>, scalar_prefetch = 0 : i64, scratch_operands = 0 : i64, tpu.core_type = #tpu.core_type<tc>, window_params = [{transform_indices = @transform_0, window_bounds = array<i64: 8, 16>}, {pipeline_mode = #tpu.pipeline_mode<synchronous>, transform_indices = @transform_1, window_bounds = array<i64: 16, 512>}, {pipeline_mode = #tpu.pipeline_mode<synchronous>, transform_indices = @transform_2, window_bounds = array<i64: 512, 256>}, {pipeline_mode = #tpu.pipeline_mode<synchronous>, transform_indices = @transform_3, window_bounds = array<i64: 256, 128>}, {pipeline_mode = #tpu.pipeline_mode<synchronous>, transform_indices = @transform_4, window_bounds = array<i64: 8, 512>}, {transform_indices = @transform_5, window_bounds = array<i64: 8, 128>}]} {
    %c0 = arith.constant 0 : index
    %c0_0 = arith.constant 0 : index
    %0 = vector.load %arg1[%c0, %c0_0] : memref<8x16xf32, #tpu.memory_space<vmem>>, vector<8x16xf32>
    %c0_1 = arith.constant 0 : index
    %c0_2 = arith.constant 0 : index
    %1 = vector.load %arg5[%c0_1, %c0_2] : memref<8x512xf32, #tpu.memory_space<vmem>>, vector<8x512xf32>
    %2 = vector.extract_strided_slice %1 {offsets = [0, 0], sizes = [1, 512], strides = [1, 1]} : vector<8x512xf32> to vector<1x512xf32>
    %3 = vector.extract_strided_slice %1 {offsets = [1, 0], sizes = [1, 256], strides = [1, 1]} : vector<8x512xf32> to vector<1x256xf32>
    %4 = vector.extract_strided_slice %1 {offsets = [2, 0], sizes = [1, 128], strides = [1, 1]} : vector<8x512xf32> to vector<1x128xf32>
    %5 = arith.truncf %0 : vector<8x16xf32> to vector<8x16xbf16>
    %c0_3 = arith.constant 0 : index
    %c0_4 = arith.constant 0 : index
    %6 = vector.load %arg2[%c0_3, %c0_4] : memref<16x512xbf16, #tpu.memory_space<vmem>>, vector<16x512xbf16>
    %cst = arith.constant dense<0.000000e+00> : vector<8x512xf32>
    %7 = tpu.matmul %5, %6, %cst {dimension_numbers = #tpu.dot_dimension_numbers<[1], [0], [0], [1], [0, 0, 1, 1], [], []>} : vector<8x16xbf16>, vector<16x512xbf16>, vector<8x512xf32> -> vector<8x512xf32>
    %8 = vector.broadcast %2 : vector<1x512xf32> to vector<8x512xf32>
    %9 = arith.addf %7, %8 : vector<8x512xf32>
    %10 = math.tanh %9 : vector<8x512xf32>
    %11 = arith.truncf %10 : vector<8x512xf32> to vector<8x512xbf16>
    %c0_5 = arith.constant 0 : index
    %c0_6 = arith.constant 0 : index
    %12 = vector.load %arg3[%c0_5, %c0_6] : memref<512x256xbf16, #tpu.memory_space<vmem>>, vector<512x256xbf16>
    %cst_7 = arith.constant dense<0.000000e+00> : vector<8x256xf32>
    %13 = tpu.matmul %11, %12, %cst_7 {dimension_numbers = #tpu.dot_dimension_numbers<[1], [0], [0], [1], [0, 0, 1, 1], [], []>} : vector<8x512xbf16>, vector<512x256xbf16>, vector<8x256xf32> -> vector<8x256xf32>
    %14 = vector.broadcast %3 : vector<1x256xf32> to vector<8x256xf32>
    %15 = arith.addf %13, %14 : vector<8x256xf32>
    %16 = math.tanh %15 : vector<8x256xf32>
    %17 = arith.truncf %16 : vector<8x256xf32> to vector<8x256xbf16>
    %c0_8 = arith.constant 0 : index
    %c0_9 = arith.constant 0 : index
    %18 = vector.load %arg4[%c0_8, %c0_9] : memref<256x128xbf16, #tpu.memory_space<vmem>>, vector<256x128xbf16>
    %cst_10 = arith.constant dense<0.000000e+00> : vector<8x128xf32>
    %19 = tpu.matmul %17, %18, %cst_10 {dimension_numbers = #tpu.dot_dimension_numbers<[1], [0], [0], [1], [0, 0, 1, 1], [], []>} : vector<8x256xbf16>, vector<256x128xbf16>, vector<8x128xf32> -> vector<8x128xf32>
    %20 = vector.broadcast %4 : vector<1x128xf32> to vector<8x128xf32>
    %21 = arith.addf %19, %20 : vector<8x128xf32>
    %22 = tpu.iota {dimensions = array<i32: 1>} : vector<8x128xi32>
    %c8_i32 = arith.constant 8 : i32
    %23 = vector.broadcast %c8_i32 : i32 to vector<8x128xi32>
    %24 = arith.cmpi slt, %22, %23 : vector<8x128xi32>
    %25 = math.tanh %21 : vector<8x128xf32>
    %26 = arith.select %24, %25, %21 : vector<8x128xi1>, vector<8x128xf32>
    %c0_11 = arith.constant 0 : index
    %c0_12 = arith.constant 0 : index
    %27 = vector.load %arg6[%c0_11, %c0_12] : memref<8x128xf32, #tpu.memory_space<vmem>>, vector<8x128xf32>
    tpu.vector_store %arg6[%c0_11, %c0_12], %26 {strides = array<i32>} : memref<8x128xf32, #tpu.memory_space<vmem>>, vector<8x128xf32>,
    return
  }
  func.func @transform_0(%arg0: i32) -> (i32, i32) {
    %c0_i32 = arith.constant 0 : i32
    %c0_i32_0 = arith.constant 0 : i32
    return %arg0, %c0_i32 : i32, i32
  }
  func.func @transform_1(%arg0: i32) -> (i32, i32) {
    %c0_i32 = arith.constant 0 : i32
    %c0_i32_0 = arith.constant 0 : i32
    %c0_i32_1 = arith.constant 0 : i32
    return %c0_i32, %c0_i32_0 : i32, i32
  }
  func.func @transform_2(%arg0: i32) -> (i32, i32) {
    %c0_i32 = arith.constant 0 : i32
    %c0_i32_0 = arith.constant 0 : i32
    %c0_i32_1 = arith.constant 0 : i32
    return %c0_i32, %c0_i32_0 : i32, i32
  }
  func.func @transform_3(%arg0: i32) -> (i32, i32) {
    %c0_i32 = arith.constant 0 : i32
    %c0_i32_0 = arith.constant 0 : i32
    %c0_i32_1 = arith.constant 0 : i32
    return %c0_i32, %c0_i32_0 : i32, i32
  }
  func.func @transform_4(%arg0: i32) -> (i32, i32) {
    %c0_i32 = arith.constant 0 : i32
    %c0_i32_0 = arith.constant 0 : i32
    %c0_i32_1 = arith.constant 0 : i32
    return %c0_i32, %c0_i32_0 : i32, i32
  }
  func.func @transform_5(%arg0: i32) -> (i32, i32) {
    %c0_i32 = arith.constant 0 : i32
    %c0_i32_0 = arith.constant 0 : i32
    return %arg0, %c0_i32 : i32, i32
  }
}

</mosaic_0001>

<llo_original>
// kernel: tpu_custom_call.1
$region0: #{tpu_custom_call.1}
  #allocation0 [shape = 'u32[]', space=smem, size = 0x4, offset = 0x4, fixed_abs, tag = 'smem constant byte address 0x4 - core index']
  #allocation1 [shape = 'u32[144,128]{1,0:T(1,128)}', space=vmem, size = 0x12000, scoped, tag = 'internal scratch']
  %s0 = inlined_call_operand.hbm [shape: f32[8,16], index: 0, kind: input, shape index: {}]
  %s1 = inlined_call_operand.hbm [shape: bf16[16,512], index: 1, kind: input, shape index: {}]
  %s2 = inlined_call_operand.hbm [shape: bf16[512,256], index: 2, kind: input, shape index: {}]
  %s3 = inlined_call_operand.hbm [shape: bf16[256,128], index: 3, kind: input, shape index: {}]
  %s4 = inlined_call_operand.hbm [shape: f32[8,512], index: 4, kind: input, shape index: {}]
  %s5 = inlined_call_operand.hbm [shape: f32[8,128], index: 5, kind: output, shape index: {}]
  %s6 = sld [smem:[#allocation0]]
  $region50: #{tpu_custom_call.1} parent=0
    _
  %s8 = ssub.s32 1, %s6
  %s9 = scalar_select 0, %s8, %s6
  $region1: #{tpu_custom_call.1} parent=0
    #allocation2 [shape = 'u8[4096]{0}', space=vmem, size = 0x1000, scoped, tag = 'input window, operand 0, single buffered']
    #allocation3 [shape = 's32[1]{0}', space=sflag, size = 0x4, scoped, tag = 'scoped memory for tpu_custom_call.1']
    #allocation4 [shape = 's32[1]{0}', space=sflag, size = 0x4, scoped, tag = 'scoped memory for tpu_custom_call.1']
    #allocation5 [shape = 'u8[16384]{0}', space=vmem, size = 0x4000, scoped, tag = 'input window, operand 1, single buffered']
    #allocation6 [shape = 's32[1]{0}', space=sflag, size = 0x4, scoped, tag = 'scoped memory for tpu_custom_call.1']
    #allocation7 [shape = 'u8[262144]{0}', space=vmem, size = 0x40000, scoped, tag = 'input window, operand 2, single buffered']
    #allocation8 [shape = 'u8[65536]{0}', space=vmem, size = 0x10000, scoped, tag = 'input window, operand 3, single buffered']
    #allocation9 [shape = 's32[1]{0}', space=sflag, size = 0x4, scoped, tag = 'scoped memory for tpu_custom_call.1']
    #allocation10 [shape = 'u8[16384]{0}', space=vmem, size = 0x4000, scoped, tag = 'input window, operand 4, single buffered']
    #allocation11 [shape = 'u8[4096]{0}', space=vmem, size = 0x1000, scoped, tag = 'output window, operand 0, single buffered']
    %10 = vsyncpa [#allocation3], 0
    %11 = vsyncpa [#allocation6], 0
    %12 = vsyncpa [#allocation9], 0
    %13 = vsyncpa [#allocation4], 0
    // Predicated region
    $region2: #{tpu_custom_call.1} parent=1 // pred_check
      _
    $region3: #{tpu_custom_call.1} parent=1 // pred_check_branch
      %15 = sbr.rel (0) target = $region5
    $region4: #{tpu_custom_call.1} parent=1 // pred_region
      %s17 = ssub.s32 128, 128
      %18 = vsyncadd [#allocation3], %s17
      %s20 = sshll.u32 [#allocation2], 4
      %s21 = int_to_ptr.vmem [resolvable:$true] %s20
      %23 = dma.hbm_to_vmem [thread:$0]  %s0, 128, %s21, [#allocation3]
    $region5: #{tpu_custom_call.1} parent=1 // pred_fallthru
      _
    // Predicated region
    $region6: #{tpu_custom_call.1} parent=1 // pred_check
      _
    $region7: #{tpu_custom_call.1} parent=1 // pred_check_branch
      %25 = sbr.rel (0) target = $region9
    $region8: #{tpu_custom_call.1} parent=1 // pred_region
      %s27 = ssub.s32 512, 512
      %28 = vsyncadd [#allocation6], %s27
      %s29 = sshll.u32 [#allocation5], 4
      %s30 = int_to_ptr.vmem [resolvable:$true] %s29
      %35 = dma.hbm_to_vmem [thread:$0]  %s1, 512, %s30, [#allocation6], 256, 256, 16
    $region9: #{tpu_custom_call.1} parent=1 // pred_fallthru
      _
    // Predicated region
    $region10: #{tpu_custom_call.1} parent=1 // pred_check
      _
    $region11: #{tpu_custom_call.1} parent=1 // pred_check_branch
      %37 = sbr.rel (0) target = $region13
    $region12: #{tpu_custom_call.1} parent=1 // pred_region
      %s39 = ssub.s32 8192, 8192
      %40 = vsyncadd [#allocation6], %s39
      %s41 = sshll.u32 [#allocation7], 4
      %s42 = int_to_ptr.vmem [resolvable:$true] %s41
      %47 = dma.hbm_to_vmem [thread:$0]  %s2, 8192, %s42, [#allocation6], 128, 128, 8
    $region13: #{tpu_custom_call.1} parent=1 // pred_fallthru
      _
    // Predicated region
    $region14: #{tpu_custom_call.1} parent=1 // pred_check
      _
    $region15: #{tpu_custom_call.1} parent=1 // pred_check_branch
      %49 = sbr.rel (0) target = $region17
    $region16: #{tpu_custom_call.1} parent=1 // pred_region
      %s51 = ssub.s32 2048, 2048
      %52 = vsyncadd [#allocation9], %s51
      %s53 = sshll.u32 [#allocation8], 4
      %s54 = int_to_ptr.vmem [resolvable:$true] %s53
      %59 = dma.hbm_to_vmem [thread:$0]  %s3, 2048, %s54, [#allocation9], 64, 64, 4
    $region17: #{tpu_custom_call.1} parent=1 // pred_fallthru
      _
    // Predicated region
    $region18: #{tpu_custom_call.1} parent=1 // pred_check
      _
    $region19: #{tpu_custom_call.1} parent=1 // pred_check_branch
      %61 = sbr.rel (0) target = $region21
    $region20: #{tpu_custom_call.1} parent=1 // pred_region
      %s63 = ssub.s32 512, 512
      %64 = vsyncadd [#allocation9], %s63
      %s66 = sshll.u32 [#allocation10], 4
      %s67 = int_to_ptr.vmem [resolvable:$true] %s66
      %69 = dma.hbm_to_vmem [thread:$0]  %s4, 512, %s67, [#allocation9]
    $region21: #{tpu_custom_call.1} parent=1 // pred_fallthru
      _
    // Predicated region
    $region22: #{tpu_custom_call.1} parent=1 // pred_check
      _
    $region23: #{tpu_custom_call.1} parent=1 // pred_check_branch
      %71 = sbr.rel (0) target = $region25
    $region24: #{tpu_custom_call.1} parent=1 // pred_region
      %72 = dma.done [#allocation3], 128
    $region25: #{tpu_custom_call.1} parent=1 // pred_fallthru
      _
    // Predicated region
    $region26: #{tpu_custom_call.1} parent=1 // pred_check
      _
    $region27: #{tpu_custom_call.1} parent=1 // pred_check_branch
      %74 = sbr.rel (0) target = $region29
    $region28: #{tpu_custom_call.1} parent=1 // pred_region
      %75 = dma.done [#allocation6], 512
    $region29: #{tpu_custom_call.1} parent=1 // pred_fallthru
      _
    // Predicated region
    $region30: #{tpu_custom_call.1} parent=1 // pred_check
      _
    $region31: #{tpu_custom_call.1} parent=1 // pred_check_branch
      %77 = sbr.rel (0) target = $region33
    $region32: #{tpu_custom_call.1} parent=1 // pred_region
      %78 = dma.done [#allocation6], 8192
    $region33: #{tpu_custom_call.1} parent=1 // pred_fallthru
      _
    // Predicated region
    $region34: #{tpu_custom_call.1} parent=1 // pred_check
      _
    $region35: #{tpu_custom_call.1} parent=1 // pred_check_branch
      %80 = sbr.rel (0) target = $region37
    $region36: #{tpu_custom_call.1} parent=1 // pred_region
      %81 = dma.done [#allocation9], 2048
    $region37: #{tpu_custom_call.1} parent=1 // pred_fallthru
      _
    // Predicated region
    $region38: #{tpu_custom_call.1} parent=1 // pred_check
      _
    $region39: #{tpu_custom_call.1} parent=1 // pred_check_branch
      %83 = sbr.rel (0) target = $region41
    $region40: #{tpu_custom_call.1} parent=1 // pred_region
      %84 = dma.done [#allocation9], 512
    $region41: #{tpu_custom_call.1} parent=1 // pred_fallthru
      _
    %v86 = vld [vmem:[#allocation2] sm:$0xff]
    %v87 = vld [vmem:[#allocation10] sm:$0xff]
    %v88 = vld [vmem:[#allocation10 + $0x8] sm:$0xff]
    %v89 = vld [vmem:[#allocation10 + $0x10] sm:$0xff]
    %v90 = vld [vmem:[#allocation10 + $0x18] sm:$0xff]
    %v91 = vpack.c.bf16 %v86, %v86
    %v92 = vld [vmem:[#allocation5] sm:$0xff]
    %v93 = vld [vmem:[#allocation5 + $0x8] sm:$0xff]
    %v94 = vld [vmem:[#allocation5 + $0x10] sm:$0xff]
    %v95 = vld [vmem:[#allocation5 + $0x18] sm:$0xff]
    %v96 = vlaneseq
    %v97 = vshrl.u32 %v96, 7
    %v98 = vsub.s32 0, %v97
    %v99 = vrot.slane %v87, %v98
    %v100 = vlaneseq
    %v101 = vshrl.u32 %v100, 7
    %v102 = vsub.s32 0, %v101
    %v103 = vrot.slane %v88, %v102
    %v104 = vlaneseq
    %v105 = vshrl.u32 %v104, 7
    %v106 = vsub.s32 0, %v105
    %v107 = vrot.slane %v89, %v106
    %v108 = vlaneseq
    %v109 = vshrl.u32 %v108, 7
    %v110 = vsub.s32 0, %v109
    %v111 = vrot.slane %v90, %v110
    %v116 = vunpack.c.l.b16 %v92
    %v117 = vunpack.c.h.b16 %v92
    %v118 = vunpack.c.l.b16 %v93
    %v119 = vunpack.c.h.b16 %v93
    %v120 = vunpack.c.l.b16 %v94
    %v121 = vunpack.c.h.b16 %v94
    %v122 = vunpack.c.l.b16 %v95
    %v123 = vunpack.c.h.b16 %v95
    %v124 = vpack.c.b16 %v120, %v116
    %v125 = vpack.c.b16 %v121, %v117
    %v126 = vpack.c.b16 %v122, %v118
    %v127 = vpack.c.b16 %v123, %v119
    %vm132 = vcmask 130048
    %v134 = vsel %vm132, %v91, 0
    %136 = vmatprep.subr.bf16.mxu0 0
    %137 = vmatpush1.bf16.msra.mxu0 0
    %138 = vmatprep.subr.bf16.mxu0 0
    %139 = vmatpush1.bf16.msra.mxu0 0
    %140 = vmatprep.subr.bf16.mxu0 0
    %141 = vmatpush1.bf16.msra.mxu0 0
    %142 = vmatprep.subr.bf16.mxu0 0
    %143 = vmatpush1.bf16.msra.mxu0 0
    %144 = vmatprep.subr.bf16.mxu0 0
    %145 = vmatpush1.bf16.msra.mxu0 0
    %146 = vmatprep.subr.bf16.mxu0 0
    %147 = vmatpush1.bf16.msra.mxu0 0
    %148 = vmatprep.subr.bf16.mxu0 0
    %149 = vmatpush1.bf16.msra.mxu0 0
    %150 = vmatprep.subr.bf16.mxu0 %v125
    %151 = vmatpush1.bf16.msra.mxu0 %v124
    %152 = vmatprep.subr.bf16.mxu0 0
    %153 = vmatpush2.bf16.msra.mxu0 0
    %154 = vmatprep.subr.bf16.mxu0 0
    %155 = vmatpush2.bf16.msra.mxu0 0
    %156 = vmatprep.subr.bf16.mxu0 0
    %157 = vmatpush2.bf16.msra.mxu0 0
    %158 = vmatprep.subr.bf16.mxu0 0
    %159 = vmatpush2.bf16.msra.mxu0 0
    %160 = vmatprep.subr.bf16.mxu0 0
    %161 = vmatpush2.bf16.msra.mxu0 0
    %162 = vmatprep.subr.bf16.mxu0 0
    %163 = vmatpush2.bf16.msra.mxu0 0
    %164 = vmatprep.subr.bf16.mxu0 0
    %165 = vmatpush2.bf16.msra.mxu0 0
    %166 = vmatprep.subr.bf16.mxu0 0
    %167 = vmatpush2.bf16.msra.mxu0 0
    %168 = vmatprep.mubr.bf16.mxu0 0
    %169 = vmatmul.mubr.bf16.gmra.mxu0 %v134
    %v170 = vpop.f32.mrf.mxu0
    %v171 = vadd.f32 %v99, %v170
    %v172 = vpop.f32.mrf.mxu0
    %v173 = vadd.f32 %v103, %v172
    %v174 = vpop.f32.mrf.mxu0
    %v175 = vpop.f32.mrf.mxu0
    %176 = vdwg.mxu0
    %177 = vmatprep.subr.bf16.mxu0 0
    %178 = vmatpush1.bf16.msra.mxu0 0
    %179 = vmatprep.subr.bf16.mxu0 0
    %180 = vmatpush1.bf16.msra.mxu0 0
    %181 = vmatprep.subr.bf16.mxu0 0
    %182 = vmatpush1.bf16.msra.mxu0 0
    %183 = vmatprep.subr.bf16.mxu0 0
    %184 = vmatpush1.bf16.msra.mxu0 0
    %185 = vmatprep.subr.bf16.mxu0 0
    %186 = vmatpush1.bf16.msra.mxu0 0
    %187 = vmatprep.subr.bf16.mxu0 0
    %188 = vmatpush1.bf16.msra.mxu0 0
    %189 = vmatprep.subr.bf16.mxu0 0
    %190 = vmatpush1.bf16.msra.mxu0 0
    %191 = vmatprep.subr.bf16.mxu0 %v127
    %192 = vmatpush1.bf16.msra.mxu0 %v126
    %193 = vmatprep.subr.bf16.mxu0 0
    %194 = vmatpush2.bf16.msra.mxu0 0
    %195 = vmatprep.subr.bf16.mxu0 0
    %196 = vmatpush2.bf16.msra.mxu0 0
    %197 = vmatprep.subr.bf16.mxu0 0
    %198 = vmatpush2.bf16.msra.mxu0 0
    %199 = vmatprep.subr.bf16.mxu0 0
    %200 = vmatpush2.bf16.msra.mxu0 0
    %201 = vmatprep.subr.bf16.mxu0 0
    %202 = vmatpush2.bf16.msra.mxu0 0
    %203 = vmatprep.subr.bf16.mxu0 0
    %204 = vmatpush2.bf16.msra.mxu0 0
    %205 = vmatprep.subr.bf16.mxu0 0
    %206 = vmatpush2.bf16.msra.mxu0 0
    %207 = vmatprep.subr.bf16.mxu0 0
    %208 = vmatpush2.bf16.msra.mxu0 0
    %209 = vmatprep.mubr.bf16.mxu0 0
    %210 = vmatmul.mubr.bf16.gmra.mxu0 %v134
    %v211 = vpop.f32.mrf.mxu0
    %v212 = vadd.f32 %v107, %v211
    %v213 = vpop.f32.mrf.mxu0
    %v214 = vadd.f32 %v111, %v213
    %v215 = vpop.f32.mrf.mxu0
    %v216 = vpop.f32.mrf.mxu0
    %217 = vdwg.mxu0
    %v218 = vtanh.pop %v171
    %v219 = vtanh.pop %v173
    %v220 = vtanh.pop %v212
    %v221 = vtanh.pop %v214
    %v222 = vpack.c.bf16 %v218, %v218
    %v223 = vpack.c.bf16 %v219, %v219
    %v224 = vpack.c.bf16 %v220, %v220
    %v225 = vpack.c.bf16 %v221, %v221
    %v226 = vld [vmem:[#allocation7] sm:$0xff]
    %v227 = vld [vmem:[#allocation7 + $0x8] sm:$0xff]
    %v228 = vld [vmem:[#allocation7 + $0x10] sm:$0xff]
    %v229 = vld [vmem:[#allocation7 + $0x18] sm:$0xff]
    %v230 = vld [vmem:[#allocation7 + $0x20] sm:$0xff]
    %v231 = vld [vmem:[#allocation7 + $0x28] sm:$0xff]
    %v232 = vld [vmem:[#allocation7 + $0x30] sm:$0xff]
    %v233 = vld [vmem:[#allocation7 + $0x38] sm:$0xff]
    %v234 = vld [vmem:[#allocation7 + $0x40] sm:$0xff]
    %v235 = vld [vmem:[#allocation7 + $0x48] sm:$0xff]
    %v236 = vld [vmem:[#allocation7 + $0x50] sm:$0xff]
    %v237 = vld [vmem:[#allocation7 + $0x58] sm:$0xff]
    %v238 = vld [vmem:[#allocation7 + $0x60] sm:$0xff]
    %v239 = vld [vmem:[#allocation7 + $0x68] sm:$0xff]
    %v240 = vld [vmem:[#allocation7 + $0x70] sm:$0xff]
    %v241 = vld [vmem:[#allocation7 + $0x78] sm:$0xff]
    %v242 = vld [vmem:[#allocation7 + $0x80] sm:$0xff]
    %v243 = vld [vmem:[#allocation7 + $0x88] sm:$0xff]
    %v244 = vld [vmem:[#allocation7 + $0x90] sm:$0xff]
    %v245 = vld [vmem:[#allocation7 + $0x98] sm:$0xff]
    %v246 = vld [vmem:[#allocation7 + $0xa0] sm:$0xff]
    %v247 = vld [vmem:[#allocation7 + $0xa8] sm:$0xff]
    %v248 = vld [vmem:[#allocation7 + $0xb0] sm:$0xff]
    %v249 = vld [vmem:[#allocation7 + $0xb8] sm:$0xff]
    %v250 = vld [vmem:[#allocation7 + $0xc0] sm:$0xff]
    %v251 = vld [vmem:[#allocation7 + $0xc8] sm:$0xff]
    %v252 = vld [vmem:[#allocation7 + $0xd0] sm:$0xff]
    %v253 = vld [vmem:[#allocation7 + $0xd8] sm:$0xff]
    %v254 = vld [vmem:[#allocation7 + $0xe0] sm:$0xff]
    %v255 = vld [vmem:[#allocation7 + $0xe8] sm:$0xff]
    %v256 = vld [vmem:[#allocation7 + $0xf0] sm:$0xff]
    %v257 = vld [vmem:[#allocation7 + $0xf8] sm:$0xff]
    %v258 = vld [vmem:[#allocation7 + $0x100] sm:$0xff]
    %v259 = vld [vmem:[#allocation7 + $0x108] sm:$0xff]
    %v260 = vld [vmem:[#allocation7 + $0x110] sm:$0xff]
    %v261 = vld [vmem:[#allocation7 + $0x118] sm:$0xff]
    %v262 = vld [vmem:[#allocation7 + $0x120] sm:$0xff]
    %v263 = vld [vmem:[#allocation7 + $0x128] sm:$0xff]
    %v264 = vld [vmem:[#allocation7 + $0x130] sm:$0xff]
    %v265 = vld [vmem:[#allocation7 + $0x138] sm:$0xff]
    %v266 = vld [vmem:[#allocation7 + $0x140] sm:$0xff]
    %v267 = vld [vmem:[#allocation7 + $0x148] sm:$0xff]
    %v268 = vld [vmem:[#allocation7 + $0x150] sm:$0xff]
    %v269 = vld [vmem:[#allocation7 + $0x158] sm:$0xff]
    %v270 = vld [vmem:[#allocation7 + $0x160] sm:$0xff]
    %v271 = vld [vmem:[#allocation7 + $0x168] sm:$0xff]
    %v272 = vld [vmem:[#allocation7 + $0x170] sm:$0xff]
    %v273 = vld [vmem:[#allocation7 + $0x178] sm:$0xff]
    %v274 = vld [vmem:[#allocation7 + $0x180] sm:$0xff]
    %v275 = vld [vmem:[#allocation7 + $0x188] sm:$0xff]
    %v276 = vld [vmem:[#allocation7 + $0x190] sm:$0xff]
    %v277 = vld [vmem:[#allocation7 + $0x198] sm:$0xff]
    %v278 = vld [vmem:[#allocation7 + $0x1a0] sm:$0xff]
    %v279 = vld [vmem:[#allocation7 + $0x1a8] sm:$0xff]
    %v280 = vld [vmem:[#allocation7 + $0x1b0] sm:$0xff]
    %v281 = vld [vmem:[#allocation7 + $0x1b8] sm:$0xff]
    %v282 = vld [vmem:[#allocation7 + $0x1c0] sm:$0xff]
    %v283 = vld [vmem:[#allocation7 + $0x1c8] sm:$0xff]
    %v284 = vld [vmem:[#allocation7 + $0x1d0] sm:$0xff]
    %v285 = vld [vmem:[#allocation7 + $0x1d8] sm:$0xff]
    %v286 = vld [vmem:[#allocation7 + $0x1e0] sm:$0xff]
    %v287 = vld [vmem:[#allocation7 + $0x1e8] sm:$0xff]
    %v288 = vld [vmem:[#allocation7 + $0x1f0] sm:$0xff]
    %v289 = vld [vmem:[#allocation7 + $0x1f8] sm:$0xff]
    %v290 = vlaneseq
    %v291 = vshrl.u32 %v290, 7
    %v292 = vsub.s32 1, %v291
    %v293 = vrot.slane %v87, %v292
    %v294 = vlaneseq
    %v295 = vshrl.u32 %v294, 7
    %v296 = vsub.s32 1, %v295
    %v297 = vrot.slane %v88, %v296
    %v362 = vunpack.c.l.b16 %v226
    %v363 = vunpack.c.h.b16 %v226
    %v364 = vunpack.c.l.b16 %v227
    %v365 = vunpack.c.h.b16 %v227
    %v366 = vunpack.c.l.b16 %v228
    %v367 = vunpack.c.h.b16 %v228
    %v368 = vunpack.c.l.b16 %v229
    %v369 = vunpack.c.h.b16 %v229
    %v370 = vunpack.c.l.b16 %v230
    %v371 = vunpack.c.h.b16 %v230
    %v372 = vunpack.c.l.b16 %v231
    %v373 = vunpack.c.h.b16 %v231
    %v374 = vunpack.c.l.b16 %v232
    %v375 = vunpack.c.h.b16 %v232
    %v376 = vunpack.c.l.b16 %v233
    %v377 = vunpack.c.h.b16 %v233
    %v378 = vunpack.c.l.b16 %v234
    %v379 = vunpack.c.h.b16 %v234
    %v380 = vunpack.c.l.b16 %v235
    %v381 = vunpack.c.h.b16 %v235
    %v382 = vunpack.c.l.b16 %v236
    %v383 = vunpack.c.h.b16 %v236
    %v384 = vunpack.c.l.b16 %v237
    %v385 = vunpack.c.h.b16 %v237
    %v386 = vunpack.c.l.b16 %v238
    %v387 = vunpack.c.h.b16 %v238
    %v388 = vunpack.c.l.b16 %v239
    %v389 = vunpack.c.h.b16 %v239
    %v390 = vunpack.c.l.b16 %v240
    %v391 = vunpack.c.h.b16 %v240
    %v392 = vunpack.c.l.b16 %v241
    %v393 = vunpack.c.h.b16 %v241
    %v394 = vunpack.c.l.b16 %v242
    %v395 = vunpack.c.h.b16 %v242
    %v396 = vunpack.c.l.b16 %v243
    %v397 = vunpack.c.h.b16 %v243
    %v398 = vunpack.c.l.b16 %v244
    %v399 = vunpack.c.h.b16 %v244
    %v400 = vunpack.c.l.b16 %v245
    %v401 = vunpack.c.h.b16 %v245
    %v402 = vunpack.c.l.b16 %v246
    %v403 = vunpack.c.h.b16 %v246
    %v404 = vunpack.c.l.b16 %v247
    %v405 = vunpack.c.h.b16 %v247
    %v406 = vunpack.c.l.b16 %v248
    %v407 = vunpack.c.h.b16 %v248
    %v408 = vunpack.c.l.b16 %v249
    %v409 = vunpack.c.h.b16 %v249
    %v410 = vunpack.c.l.b16 %v250
    %v411 = vunpack.c.h.b16 %v250
    %v412 = vunpack.c.l.b16 %v251
    %v413 = vunpack.c.h.b16 %v251
    %v414 = vunpack.c.l.b16 %v252
    %v415 = vunpack.c.h.b16 %v252
    %v416 = vunpack.c.l.b16 %v253
    %v417 = vunpack.c.h.b16 %v253
    %v418 = vunpack.c.l.b16 %v254
    %v419 = vunpack.c.h.b16 %v254
    %v420 = vunpack.c.l.b16 %v255
    %v421 = vunpack.c.h.b16 %v255
    %v422 = vunpack.c.l.b16 %v256
    %v423 = vunpack.c.h.b16 %v256
    %v424 = vunpack.c.l.b16 %v257
    %v425 = vunpack.c.h.b16 %v257
    %v426 = vunpack.c.l.b16 %v258
    %v427 = vunpack.c.h.b16 %v258
    %v428 = vunpack.c.l.b16 %v259
    %v429 = vunpack.c.h.b16 %v259
    %v430 = vunpack.c.l.b16 %v260
    %v431 = vunpack.c.h.b16 %v260
    %v432 = vunpack.c.l.b16 %v261
    %v433 = vunpack.c.h.b16 %v261
    %v434 = vunpack.c.l.b16 %v262
    %v435 = vunpack.c.h.b16 %v262
    %v436 = vunpack.c.l.b16 %v263
    %v437 = vunpack.c.h.b16 %v263
    %v438 = vunpack.c.l.b16 %v264
    %v439 = vunpack.c.h.b16 %v264
    %v440 = vunpack.c.l.b16 %v265
    %v441 = vunpack.c.h.b16 %v265
    %v442 = vunpack.c.l.b16 %v266
    %v443 = vunpack.c.h.b16 %v266
    %v444 = vunpack.c.l.b16 %v267
    %v445 = vunpack.c.h.b16 %v267
    %v446 = vunpack.c.l.b16 %v268
    %v447 = vunpack.c.h.b16 %v268
    %v448 = vunpack.c.l.b16 %v269
    %v449 = vunpack.c.h.b16 %v269
    %v450 = vunpack.c.l.b16 %v270
    %v451 = vunpack.c.h.b16 %v270
    %v452 = vunpack.c.l.b16 %v271
    %v453 = vunpack.c.h.b16 %v271
    %v454 = vunpack.c.l.b16 %v272
    %v455 = vunpack.c.h.b16 %v272
    %v456 = vunpack.c.l.b16 %v273
    %v457 = vunpack.c.h.b16 %v273
    %v458 = vunpack.c.l.b16 %v274
    %v459 = vunpack.c.h.b16 %v274
    %v460 = vunpack.c.l.b16 %v275
    %v461 = vunpack.c.h.b16 %v275
    %v462 = vunpack.c.l.b16 %v276
    %v463 = vunpack.c.h.b16 %v276
    %v464 = vunpack.c.l.b16 %v277
    %v465 = vunpack.c.h.b16 %v277
    %v466 = vunpack.c.l.b16 %v278
    %v467 = vunpack.c.h.b16 %v278
    %v468 = vunpack.c.l.b16 %v279
    %v469 = vunpack.c.h.b16 %v279
    %v470 = vunpack.c.l.b16 %v280
    %v471 = vunpack.c.h.b16 %v280
    %v472 = vunpack.c.l.b16 %v281
    %v473 = vunpack.c.h.b16 %v281
    %v474 = vunpack.c.l.b16 %v282
    %v475 = vunpack.c.h.b16 %v282
    %v476 = vunpack.c.l.b16 %v283
    %v477 = vunpack.c.h.b16 %v283
    %v478 = vunpack.c.l.b16 %v284
    %v479 = vunpack.c.h.b16 %v284
    %v480 = vunpack.c.l.b16 %v285
    %v481 = vunpack.c.h.b16 %v285
    %v482 = vunpack.c.l.b16 %v286
    %v483 = vunpack.c.h.b16 %v286
    %v484 = vunpack.c.l.b16 %v287
    %v485 = vunpack.c.h.b16 %v287
    %v486 = vunpack.c.l.b16 %v288
    %v487 = vunpack.c.h.b16 %v288
    %v488 = vunpack.c.l.b16 %v289
    %v489 = vunpack.c.h.b16 %v289
    %v490 = vpack.c.b16 %v364, %v362
    %v491 = vpack.c.b16 %v365, %v363
    %v492 = vpack.c.b16 %v368, %v366
    %v493 = vpack.c.b16 %v369, %v367
    %v494 = vpack.c.b16 %v372, %v370
    %v495 = vpack.c.b16 %v373, %v371
    %v496 = vpack.c.b16 %v376, %v374
    %v497 = vpack.c.b16 %v377, %v375
    %v498 = vpack.c.b16 %v380, %v378
    %v499 = vpack.c.b16 %v381, %v379
    %v500 = vpack.c.b16 %v384, %v382
    %v501 = vpack.c.b16 %v385, %v383
    %v502 = vpack.c.b16 %v388, %v386
    %v503 = vpack.c.b16 %v389, %v387
    %v504 = vpack.c.b16 %v392, %v390
    %v505 = vpack.c.b16 %v393, %v391
    %v506 = vpack.c.b16 %v396, %v394
    %v507 = vpack.c.b16 %v397, %v395
    %v508 = vpack.c.b16 %v400, %v398
    %v509 = vpack.c.b16 %v401, %v399
    %v510 = vpack.c.b16 %v404, %v402
    %v511 = vpack.c.b16 %v405, %v403
    %v512 = vpack.c.b16 %v408, %v406
    %v513 = vpack.c.b16 %v409, %v407
    %v514 = vpack.c.b16 %v412, %v410
    %v515 = vpack.c.b16 %v413, %v411
    %v516 = vpack.c.b16 %v416, %v414
    %v517 = vpack.c.b16 %v417, %v415
    %v518 = vpack.c.b16 %v420, %v418
    %v519 = vpack.c.b16 %v421, %v419
    %v520 = vpack.c.b16 %v424, %v422
    %v521 = vpack.c.b16 %v425, %v423
    %v522 = vpack.c.b16 %v428, %v426
    %v523 = vpack.c.b16 %v429, %v427
    %v524 = vpack.c.b16 %v432, %v430
    %v525 = vpack.c.b16 %v433, %v431
    %v526 = vpack.c.b16 %v436, %v434
    %v527 = vpack.c.b16 %v437, %v435
    %v528 = vpack.c.b16 %v440, %v438
    %v529 = vpack.c.b16 %v441, %v439
    %v530 = vpack.c.b16 %v444, %v442
    %v531 = vpack.c.b16 %v445, %v443
    %v532 = vpack.c.b16 %v448, %v446
    %v533 = vpack.c.b16 %v449, %v447
    %v534 = vpack.c.b16 %v452, %v450
    %v535 = vpack.c.b16 %v453, %v451
    %v536 = vpack.c.b16 %v456, %v454
    %v537 = vpack.c.b16 %v457, %v455
    %v538 = vpack.c.b16 %v460, %v458
    %v539 = vpack.c.b16 %v461, %v459
    %v540 = vpack.c.b16 %v464, %v462
    %v541 = vpack.c.b16 %v465, %v463
    %v542 = vpack.c.b16 %v468, %v466
    %v543 = vpack.c.b16 %v469, %v467
    %v544 = vpack.c.b16 %v472, %v470
    %v545 = vpack.c.b16 %v473, %v471
    %v546 = vpack.c.b16 %v476, %v474
    %v547 = vpack.c.b16 %v477, %v475
    %v548 = vpack.c.b16 %v480, %v478
    %v549 = vpack.c.b16 %v481, %v479
    %v550 = vpack.c.b16 %v484, %v482
    %v551 = vpack.c.b16 %v485, %v483
    %v552 = vpack.c.b16 %v488, %v486
    %v553 = vpack.c.b16 %v489, %v487
    %618 = vmatprep.subr.bf16.mxu0 %v505
    %619 = vmatpush1.bf16.msra.mxu0 %v504
    %620 = vmatprep.subr.bf16.mxu0 %v503
    %621 = vmatpush1.bf16.msra.mxu0 %v502
    %622 = vmatprep.subr.bf16.mxu0 %v501
    %623 = vmatpush1.bf16.msra.mxu0 %v500
    %624 = vmatprep.subr.bf16.mxu0 %v499
    %625 = vmatpush1.bf16.msra.mxu0 %v498
    %626 = vmatprep.subr.bf16.mxu0 %v497
    %627 = vmatpush1.bf16.msra.mxu0 %v496
    %628 = vmatprep.subr.bf16.mxu0 %v495
    %629 = vmatpush1.bf16.msra.mxu0 %v494
    %630 = vmatprep.subr.bf16.mxu0 %v493
    %631 = vmatpush1.bf16.msra.mxu0 %v492
    %632 = vmatprep.subr.bf16.mxu0 %v491
    %633 = vmatpush1.bf16.msra.mxu0 %v490
    %634 = vmatprep.subr.bf16.mxu0 %v521
    %635 = vmatpush2.bf16.msra.mxu0 %v520
    %636 = vmatprep.subr.bf16.mxu0 %v519
    %637 = vmatpush2.bf16.msra.mxu0 %v518
    %638 = vmatprep.subr.bf16.mxu0 %v517
    %639 = vmatpush2.bf16.msra.mxu0 %v516
    %640 = vmatprep.subr.bf16.mxu0 %v515
    %641 = vmatpush2.bf16.msra.mxu0 %v514
    %642 = vmatprep.subr.bf16.mxu0 %v513
    %643 = vmatpush2.bf16.msra.mxu0 %v512
    %644 = vmatprep.subr.bf16.mxu0 %v511
    %645 = vmatpush2.bf16.msra.mxu0 %v510
    %646 = vmatprep.subr.bf16.mxu0 %v509
    %647 = vmatpush2.bf16.msra.mxu0 %v508
    %648 = vmatprep.subr.bf16.mxu0 %v507
    %649 = vmatpush2.bf16.msra.mxu0 %v506
    %650 = vmatprep.mubr.bf16.mxu0 %v223
    %651 = vmatmul.mubr.bf16.gmra.mxu0 %v222
    %v652 = vpop.f32.mrf.mxu0
    %v653 = vadd.f32 %v293, %v652
    %v654 = vpop.f32.mrf.mxu0
    %v655 = vadd.f32 %v297, %v654
    %v656 = vpop.f32.mrf.mxu0
    %v657 = vpop.f32.mrf.mxu0
    %658 = vdwg.mxu0
    %659 = vmatprep.subr.bf16.mxu0 %v537
    %660 = vmatpush1.bf16.msra.mxu0 %v536
    %661 = vmatprep.subr.bf16.mxu0 %v535
    %662 = vmatpush1.bf16.msra.mxu0 %v534
    %663 = vmatprep.subr.bf16.mxu0 %v533
    %664 = vmatpush1.bf16.msra.mxu0 %v532
    %665 = vmatprep.subr.bf16.mxu0 %v531
    %666 = vmatpush1.bf16.msra.mxu0 %v530
    %667 = vmatprep.subr.bf16.mxu0 %v529
    %668 = vmatpush1.bf16.msra.mxu0 %v528
    %669 = vmatprep.subr.bf16.mxu0 %v527
    %670 = vmatpush1.bf16.msra.mxu0 %v526
    %671 = vmatprep.subr.bf16.mxu0 %v525
    %672 = vmatpush1.bf16.msra.mxu0 %v524
    %673 = vmatprep.subr.bf16.mxu0 %v523
    %674 = vmatpush1.bf16.msra.mxu0 %v522
    %675 = vmatprep.subr.bf16.mxu0 %v553
    %676 = vmatpush2.bf16.msra.mxu0 %v552
    %677 = vmatprep.subr.bf16.mxu0 %v551
    %678 = vmatpush2.bf16.msra.mxu0 %v550
    %679 = vmatprep.subr.bf16.mxu0 %v549
    %680 = vmatpush2.bf16.msra.mxu0 %v548
    %681 = vmatprep.subr.bf16.mxu0 %v547
    %682 = vmatpush2.bf16.msra.mxu0 %v546
    %683 = vmatprep.subr.bf16.mxu0 %v545
    %684 = vmatpush2.bf16.msra.mxu0 %v544
    %685 = vmatprep.subr.bf16.mxu0 %v543
    %686 = vmatpush2.bf16.msra.mxu0 %v542
    %687 = vmatprep.subr.bf16.mxu0 %v541
    %688 = vmatpush2.bf16.msra.mxu0 %v540
    %689 = vmatprep.subr.bf16.mxu0 %v539
    %690 = vmatpush2.bf16.msra.mxu0 %v538
    %691 = vmatprep.mubr.bf16.mxu0 %v225
    %692 = vmatmul.mubr.bf16.gmra.mxu0 %v224
    %v693 = vpop.f32.mrf.mxu0
    %v694 = vadd.f32 %v653, %v693
    %v695 = vpop.f32.mrf.mxu0
    %v696 = vadd.f32 %v655, %v695
    %v697 = vpop.f32.mrf.mxu0
    %v698 = vpop.f32.mrf.mxu0
    %699 = vdwg.mxu0
    %v700 = vtanh.pop %v694
    %v701 = vtanh.pop %v696
    %v702 = vpack.c.bf16 %v700, %v700
    %v703 = vpack.c.bf16 %v701, %v701
    %v704 = vld [vmem:[#allocation8] sm:$0xf]
    %v705 = vld [vmem:[#allocation8 + $0x4] sm:$0xf]
    %v706 = vld [vmem:[#allocation8 + $0x8] sm:$0xf]
    %v707 = vld [vmem:[#allocation8 + $0xc] sm:$0xf]
    %v708 = vld [vmem:[#allocation8 + $0x10] sm:$0xf]
    %v709 = vld [vmem:[#allocation8 + $0x14] sm:$0xf]
    %v710 = vld [vmem:[#allocation8 + $0x18] sm:$0xf]
    %v711 = vld [vmem:[#allocation8 + $0x1c] sm:$0xf]
    %v712 = vld [vmem:[#allocation8 + $0x20] sm:$0xf]
    %v713 = vld [vmem:[#allocation8 + $0x24] sm:$0xf]
    %v714 = vld [vmem:[#allocation8 + $0x28] sm:$0xf]
    %v715 = vld [vmem:[#allocation8 + $0x2c] sm:$0xf]
    %v716 = vld [vmem:[#allocation8 + $0x30] sm:$0xf]
    %v717 = vld [vmem:[#allocation8 + $0x34] sm:$0xf]
    %v718 = vld [vmem:[#allocation8 + $0x38] sm:$0xf]
    %v719 = vld [vmem:[#allocation8 + $0x3c] sm:$0xf]
    %v720 = vld [vmem:[#allocation8 + $0x40] sm:$0xf]
    %v721 = vld [vmem:[#allocation8 + $0x44] sm:$0xf]
    %v722 = vld [vmem:[#allocation8 + $0x48] sm:$0xf]
    %v723 = vld [vmem:[#allocation8 + $0x4c] sm:$0xf]
    %v724 = vld [vmem:[#allocation8 + $0x50] sm:$0xf]
    %v725 = vld [vmem:[#allocation8 + $0x54] sm:$0xf]
    %v726 = vld [vmem:[#allocation8 + $0x58] sm:$0xf]
    %v727 = vld [vmem:[#allocation8 + $0x5c] sm:$0xf]
    %v728 = vld [vmem:[#allocation8 + $0x60] sm:$0xf]
    %v729 = vld [vmem:[#allocation8 + $0x64] sm:$0xf]
    %v730 = vld [vmem:[#allocation8 + $0x68] sm:$0xf]
    %v731 = vld [vmem:[#allocation8 + $0x6c] sm:$0xf]
    %v732 = vld [vmem:[#allocation8 + $0x70] sm:$0xf]
    %v733 = vld [vmem:[#allocation8 + $0x74] sm:$0xf]
    %v734 = vld [vmem:[#allocation8 + $0x78] sm:$0xf]
    %v735 = vld [vmem:[#allocation8 + $0x7c] sm:$0xf]
    %v736 = vlaneseq
    %v737 = vshrl.u32 %v736, 7
    %v738 = vsub.s32 2, %v737
    %v739 = vrot.slane %v87, %v738
    %v772 = vunpack.c.l.b16 %v704
    %v773 = vunpack.c.l.b16 %v705
    %v774 = vunpack.c.l.b16 %v706
    %v775 = vunpack.c.l.b16 %v707
    %v776 = vunpack.c.l.b16 %v708
    %v777 = vunpack.c.l.b16 %v709
    %v778 = vunpack.c.l.b16 %v710
    %v779 = vunpack.c.l.b16 %v711
    %v780 = vunpack.c.l.b16 %v712
    %v781 = vunpack.c.l.b16 %v713
    %v782 = vunpack.c.l.b16 %v714
    %v783 = vunpack.c.l.b16 %v715
    %v784 = vunpack.c.l.b16 %v716
    %v785 = vunpack.c.l.b16 %v717
    %v786 = vunpack.c.l.b16 %v718
    %v787 = vunpack.c.l.b16 %v719
    %v788 = vunpack.c.l.b16 %v720
    %v789 = vunpack.c.l.b16 %v721
    %v790 = vunpack.c.l.b16 %v722
    %v791 = vunpack.c.l.b16 %v723
    %v792 = vunpack.c.l.b16 %v724
    %v793 = vunpack.c.l.b16 %v725
    %v794 = vunpack.c.l.b16 %v726
    %v795 = vunpack.c.l.b16 %v727
    %v796 = vunpack.c.l.b16 %v728
    %v797 = vunpack.c.l.b16 %v729
    %v798 = vunpack.c.l.b16 %v730
    %v799 = vunpack.c.l.b16 %v731
    %v800 = vunpack.c.l.b16 %v732
    %v801 = vunpack.c.l.b16 %v733
    %v802 = vunpack.c.l.b16 %v734
    %v803 = vunpack.c.l.b16 %v735
    %v804 = vpack.c.b16 %v773, %v772
    %v805 = vpack.c.b16 %v775, %v774
    %v806 = vpack.c.b16 %v777, %v776
    %v807 = vpack.c.b16 %v779, %v778
    %v808 = vpack.c.b16 %v781, %v780
    %v809 = vpack.c.b16 %v783, %v782
    %v810 = vpack.c.b16 %v785, %v784
    %v811 = vpack.c.b16 %v787, %v786
    %v812 = vpack.c.b16 %v789, %v788
    %v813 = vpack.c.b16 %v791, %v790
    %v814 = vpack.c.b16 %v793, %v792
    %v815 = vpack.c.b16 %v795, %v794
    %v816 = vpack.c.b16 %v797, %v796
    %v817 = vpack.c.b16 %v799, %v798
    %v818 = vpack.c.b16 %v801, %v800
    %v819 = vpack.c.b16 %v803, %v802
    %836 = vmatprep.subr.bf16.mxu0 0
    %837 = vmatpush1.bf16.msra.mxu0 %v811
    %838 = vmatprep.subr.bf16.mxu0 0
    %839 = vmatpush1.bf16.msra.mxu0 %v810
    %840 = vmatprep.subr.bf16.mxu0 0
    %841 = vmatpush1.bf16.msra.mxu0 %v809
    %842 = vmatprep.subr.bf16.mxu0 0
    %843 = vmatpush1.bf16.msra.mxu0 %v808
    %844 = vmatprep.subr.bf16.mxu0 0
    %845 = vmatpush1.bf16.msra.mxu0 %v807
    %846 = vmatprep.subr.bf16.mxu0 0
    %847 = vmatpush1.bf16.msra.mxu0 %v806
    %848 = vmatprep.subr.bf16.mxu0 0
    %849 = vmatpush1.bf16.msra.mxu0 %v805
    %850 = vmatprep.subr.bf16.mxu0 0
    %851 = vmatpush1.bf16.msra.mxu0 %v804
    %852 = vmatprep.subr.bf16.mxu0 0
    %853 = vmatpush2.bf16.msra.mxu0 %v819
    %854 = vmatprep.subr.bf16.mxu0 0
    %855 = vmatpush2.bf16.msra.mxu0 %v818
    %856 = vmatprep.subr.bf16.mxu0 0
    %857 = vmatpush2.bf16.msra.mxu0 %v817
    %858 = vmatprep.subr.bf16.mxu0 0
    %859 = vmatpush2.bf16.msra.mxu0 %v816
    %860 = vmatprep.subr.bf16.mxu0 0
    %861 = vmatpush2.bf16.msra.mxu0 %v815
    %862 = vmatprep.subr.bf16.mxu0 0
    %863 = vmatpush2.bf16.msra.mxu0 %v814
    %864 = vmatprep.subr.bf16.mxu0 0
    %865 = vmatpush2.bf16.msra.mxu0 %v813
    %866 = vmatprep.subr.bf16.mxu0 0
    %867 = vmatpush2.bf16.msra.mxu0 %v812
    %868 = vmatprep.mubr.bf16.mxu0 %v703
    %869 = vmatmul.mubr.bf16.gmra.mxu0 %v702
    %v870 = vpop.f32.mrf.mxu0
    %v871 = vadd.f32 %v739, %v870
    %v872 = vpop.f32.mrf.mxu0
    %v873 = vpop.f32.mrf.mxu0
    %v874 = vpop.f32.mrf.mxu0
    %875 = vdwg.mxu0
    %v876 = vlaneseq
    %v877 = vand.u32 %v876, 127
    %vm878 = vcmp.lt.s32.totalorder %v877, 8
    %v879 = vtanh.pop %v871
    %v880 = vsel %vm878, %v879, %v871
    %881 = vst [vmem:[#allocation11] sm:$0xff] %v880
    // Predicated region
    $region42: #{tpu_custom_call.1} parent=1 // pred_check
      _
    $region43: #{tpu_custom_call.1} parent=1 // pred_check_branch
      %883 = sbr.rel (0) target = $region45
    $region44: #{tpu_custom_call.1} parent=1 // pred_region
      %s885 = ssub.s32 128, 128
      %886 = vsyncadd [#allocation4], %s885
      %s888 = sshll.u32 [#allocation11], 4
      %s889 = int_to_ptr.vmem [resolvable:$true] %s888
      %891 = dma.vmem_to_hbm [thread:$0]  %s889, 128, %s5, [#allocation4]
    $region45: #{tpu_custom_call.1} parent=1 // pred_fallthru
      _
    // Predicated region
    $region46: #{tpu_custom_call.1} parent=1 // pred_check
      _
    $region47: #{tpu_custom_call.1} parent=1 // pred_check_branch
      %893 = sbr.rel (0) target = $region49
    $region48: #{tpu_custom_call.1} parent=1 // pred_region
      %894 = dma.done [#allocation4], 128
    $region49: #{tpu_custom_call.1} parent=1 // pred_fallthru
      _
    %895 = vsyncpa [#allocation3], 1
    %896 = vsyncpa [#allocation6], 1
    %897 = vsyncpa [#allocation9], 1
    %898 = vsyncpa [#allocation4], 1

</llo_original>
